<compile_context>
chip_gen: v7x
topology: tpu7x:2x2x1
jax: 0.10.0
libtpu: 0.0.40
codegen_flags: <defaults>
</compile_context>

<pallas_src>
import functools

import jax
import jax.numpy as jnp
from jax import lax
from jax.experimental import pallas as pl
from jax.experimental.pallas import tpu as pltpu

STATE_SIZE = 6      # HIVPatient observation space
ACTION_SIZE = 4     # HIVPatient action space
H1 = 256
H2 = 128
K1 = 8              # fc1 contraction padded to 8: cols 0..5 = x, 6 = 1.0, 7 = 0
HEAD_W = 8          # fused head width: [v+a0..v+a3, sum(a), 0, 0, 0]
LN_EPS = 1e-5


# --------------------------------------------------------------------------
# In-kernel helpers
# --------------------------------------------------------------------------
def _ln_relu(h, gamma, beta):
    """LayerNorm + affine + ReLU.

    Uses sum(h) and sum(h*h) so the two cross-lane reductions are independent
    (shorter XLU dependency chain); rsqrt lands on the EUP slot.
    """
    n = h.shape[-1]
    inv_n = 1.0 / n
    s = jnp.sum(h, axis=-1, keepdims=True)
    s2 = jnp.sum(h * h, axis=-1, keepdims=True)
    mu = s * inv_n
    var = s2 * inv_n - mu * mu
    r = lax.rsqrt(var + LN_EPS)                      # (TM, 1), EUP
    y = ((h - mu) * r) * gamma + beta
    return jnp.maximum(y, 0.0)


def _tile_forward(x_ref, w1_ref, p1_ref, w2_ref, p2_ref, wh_ref):
    """(TM, K1) input tile -> (TM, HEAD_W) fused-head output (f32)."""
    # fc1 on the MXU; b1 is folded into w1 row 6 via the ones column of x.
    h1 = jnp.dot(x_ref[...].astype(jnp.bfloat16), w1_ref[...],
                 preferred_element_type=jnp.float32)
    h1 = _ln_relu(h1, p1_ref[0:1, :], p1_ref[1:2, :])          # gamma1, beta1

    # fc2: bf16 MXU operands, f32 accumulation.
    h2 = jnp.dot(h1.astype(jnp.bfloat16), w2_ref[...],
                 preferred_element_type=jnp.float32) + p2_ref[0:1, :]
    h2 = _ln_relu(h2, p2_ref[1:2, :], p2_ref[2:3, :])          # gamma2, beta2

    # fused dueling head: cols 0..3 = value + adv_j, col 4 = sum_j adv_j.
    head_bias = p2_ref[3:4, :][:, 0:HEAD_W]
    q = jnp.dot(h2.astype(jnp.bfloat16), wh_ref[...],
                preferred_element_type=jnp.float32) + head_bias
    return q


# --------------------------------------------------------------------------
# Kernels
# --------------------------------------------------------------------------
def mlp_kernel(x_ref, w1_ref, p1_ref, w2_ref, p2_ref, wh_ref, q_ref):
    """Multi-tile path: emit (TM, HEAD_W); mean/subtract is done in XLA."""
    q_ref[...] = _tile_forward(x_ref, w1_ref, p1_ref, w2_ref, p2_ref, wh_ref)


def mlp_fused_kernel(x_ref, w1_ref, p1_ref, w2_ref, p2_ref, wh_ref, out_ref,
                     *, n_valid):
    """Single-tile path: global advantage mean + subtract fused in-kernel."""
    q = _tile_forward(x_ref, w1_ref, p1_ref, w2_ref, p2_ref, wh_ref)
    adv_sums = q[:, ACTION_SIZE:ACTION_SIZE + 1]                # (TM, 1)
    if n_valid != q.shape[0]:                                   # mask padded rows
        rows = lax.broadcasted_iota(jnp.int32, adv_sums.shape, 0)
        adv_sums = jnp.where(rows < n_valid, adv_sums, 0.0)
    mean = jnp.sum(adv_sums) * (1.0 / (n_valid * ACTION_SIZE))
    out_ref[...] = q[:, 0:ACTION_SIZE] - mean


# --------------------------------------------------------------------------
# Wrapper
# --------------------------------------------------------------------------
def _round_up(n, m):
    return ((n + m - 1) // m) * m


def _pack_params(p):
    """Pack PyTorch-shaped params into lane-dense slabs + bf16 matmul weights."""
    S, A = STATE_SIZE, ACTION_SIZE

    # fc1 weights padded to K=8; row 6 = b1 (applied through the ones column).
    w1p = jnp.zeros((K1, H1), jnp.float32)
    w1p = w1p.at[0:S].set(p["w1"])
    w1p = w1p.at[S].set(p["b1"].reshape(H1))
    w1p = w1p.astype(jnp.bfloat16)

    # LN1 affine params.
    p1 = jnp.stack([p["g1"].reshape(H1), p["bt1"].reshape(H1)])     # (2, 256)

    w2 = p["w2"].astype(jnp.bfloat16)                               # (256, 128)

    # Fused head weights: fold value column into every advantage column and
    # add an advantage-row-sum column that feeds the global mean.
    wh = jnp.zeros((H2, HEAD_W), jnp.float32)
    wh = wh.at[:, 0:A].set(p["wa"] + p["wv"])                       # (128,4)+(128,1)
    wh = wh.at[:, A].set(jnp.sum(p["wa"], axis=1))
    wh = wh.astype(jnp.bfloat16)

    bv = p["bv"].reshape(())
    ba = p["ba"].reshape(A)
    bh = jnp.zeros((HEAD_W,), jnp.float32)
    bh = bh.at[0:A].set(ba + bv)
    bh = bh.at[A].set(jnp.sum(ba))

    # b2 / LN2 affine / head bias packed into one (4, 128) f32 slab.
    p2 = jnp.zeros((4, H2), jnp.float32)
    p2 = p2.at[0].set(p["b2"].reshape(H2))
    p2 = p2.at[1].set(p["g2"].reshape(H2))
    p2 = p2.at[2].set(p["bt2"].reshape(H2))
    p2 = p2.at[3, 0:HEAD_W].set(bh)

    return w1p, p1, w2, p2, wh


def _pad_input(x, b_pad):
    """(B, 6) -> (b_pad, 8): cols 0..5 = x, col 6 = 1.0 (bias), col 7 = 0."""
    B = x.shape[0]
    ones = jnp.ones((B, 1), jnp.float32)
    zeros = jnp.zeros((B, 1), jnp.float32)
    xp = jnp.concatenate([x.astype(jnp.float32), ones, zeros], axis=1)
    if b_pad != B:
        xp = jnp.pad(xp, ((0, b_pad - B), (0, 0)))
    return xp


def qnet_dueling_forward(x, params, *, tile_m=256):
    B = x.shape[0]
    A = ACTION_SIZE
    w1p, p1, w2, p2, wh = _pack_params(params)

    B8 = _round_up(max(B, 1), 8)

    cparams = pltpu.CompilerParams(
        dimension_semantics=("parallel",),           # megacore-shard batch tiles
        vmem_limit_bytes=32 * 1024 * 1024,
    )
    param_bytes = (w1p.size * 2 + p1.size * 4 + w2.size * 2
                   + p2.size * 4 + wh.size * 2)
    flops_per_row = 2 * (K1 * H1 + H1 * H2 + H2 * HEAD_W)

    param_specs = [
        pl.BlockSpec(w1p.shape, lambda i: (0, 0)),   # params stay VMEM-resident
        pl.BlockSpec(p1.shape, lambda i: (0, 0)),
        pl.BlockSpec(w2.shape, lambda i: (0, 0)),
        pl.BlockSpec(p2.shape, lambda i: (0, 0)),
        pl.BlockSpec(wh.shape, lambda i: (0, 0)),
    ]

    # ---------------- single-tile path (inference / act()) ----------------
    if B8 <= tile_m:
        TM = B8
        xp = _pad_input(x, TM)
        out = pl.pallas_call(
            functools.partial(mlp_fused_kernel, n_valid=B),
            out_shape=jax.ShapeDtypeStruct((TM, A), jnp.float32),
            grid=(1,),
            in_specs=[pl.BlockSpec((TM, K1), lambda i: (0, 0))] + param_specs,
            out_specs=pl.BlockSpec((TM, A), lambda i: (0, 0)),
            compiler_params=cparams,
            cost_estimate=pl.CostEstimate(
                flops=TM * flops_per_row,
                transcendentals=2 * TM,
                bytes_accessed=TM * (K1 + A) * 4 + param_bytes),
        )(xp, w1p, p1, w2, p2, wh)
        return out[:B]

    # ---------------- multi-tile path (training batches) ------------------
    # TM chosen to minimize padding while keeping >= 2 grid steps (v7x has
    # 2 TensorCores; the "parallel" batch axis shards across them).
    n_tiles = max(2, pl.cdiv(B8, tile_m))
    TM = _round_up(pl.cdiv(B8, n_tiles), 8)
    B_pad = n_tiles * TM
    xp = _pad_input(x, B_pad)

    q_raw = pl.pallas_call(
        mlp_kernel,
        out_shape=jax.ShapeDtypeStruct((B_pad, HEAD_W), jnp.float32),
        grid=(n_tiles,),
        in_specs=[pl.BlockSpec((TM, K1), lambda i: (i, 0))] + param_specs,
        out_specs=pl.BlockSpec((TM, HEAD_W), lambda i: (i, 0)),
        compiler_params=cparams,
        cost_estimate=pl.CostEstimate(
            flops=B_pad * flops_per_row,
            transcendentals=2 * B_pad,
            bytes_accessed=B_pad * (K1 + HEAD_W) * 4 + param_bytes),
    )(xp, w1p, p1, w2, p2, wh)

    # Global advantage mean over the REAL batch rows only (torch .mean() is a
    # scalar over B x A).  Column ACTION_SIZE holds the per-row advantage sum,
    # so this is one tiny reduction + an elementwise subtract that XLA fuses.
    adv_mean = jnp.sum(q_raw[:B, ACTION_SIZE]) / jnp.float32(B * ACTION_SIZE)
    return q_raw[:B, 0:ACTION_SIZE] - adv_mean


# --------------------------------------------------------------------------
# Deterministic synthetic parameters (PyTorch shapes, weights pre-transposed
# to (in_features, out_features)) and a pure-f32 reference.
# --------------------------------------------------------------------------
def init_params(key):
    ks = jax.random.split(key, 8)

    def lin(kw, kb, fan_in, fan_out):
        bound = 1.0 / jnp.sqrt(fan_in)
        w = jax.random.uniform(kw, (fan_in, fan_out), jnp.float32, -bound, bound)
        b = jax.random.uniform(kb, (1, fan_out), jnp.float32, -bound, bound)
        return w, b

    w1, b1 = lin(ks[0], ks[1], STATE_SIZE, H1)
    w2, b2 = lin(ks[2], ks[3], H1, H2)
    wv, bv = lin(ks[4], ks[5], H2, 1)
    wa, ba = lin(ks[6], ks[7], H2, ACTION_SIZE)

    return dict(
        w1=w1, b1=b1,
        g1=jnp.ones((1, H1), jnp.float32), bt1=jnp.zeros((1, H1), jnp.float32),
        w2=w2, b2=b2,
        g2=jnp.ones((1, H2), jnp.float32), bt2=jnp.zeros((1, H2), jnp.float32),
        wv=wv, bv=bv,
        wa=wa, ba=ba,
    )


def _layernorm_ref(h, gamma, beta):
    mu = jnp.mean(h, axis=-1, keepdims=True)
    var = jnp.mean((h - mu) * (h - mu), axis=-1, keepdims=True)
    return (h - mu) * lax.rsqrt(var + LN_EPS) * gamma + beta


def reference_forward(x, p):
    """Pure-JAX f32 reference (exact torch semantics)."""
    h1 = jnp.maximum(_layernorm_ref(x @ p["w1"] + p["b1"], p["g1"], p["bt1"]), 0.0)
    h2 = jnp.maximum(_layernorm_ref(h1 @ p["w2"] + p["b2"], p["g2"], p["bt2"]), 0.0)
    value = h2 @ p["wv"] + p["bv"]
    adv = h2 @ p["wa"] + p["ba"]
    return value + adv - jnp.mean(adv)


if __name__ == "__main__":
    key = jax.random.PRNGKey(0)
    k_x, k_x2, k_p = jax.random.split(key, 3)
    params = init_params(k_p)

    # Small-batch (act()) path: single fused kernel, grid=(1,).
    B = 8
    x = jax.random.normal(k_x, (B, STATE_SIZE), jnp.float32)
    out = jax.block_until_ready(qnet_dueling_forward(x, params))
    ref = reference_forward(x, params)
    assert out.shape == (B, ACTION_SIZE)
    # bf16 MXU operands (f32 accumulation) limit agreement with the pure-f32
    # reference to ~1e-2 relative; structural errors would be far larger.
    assert jnp.allclose(out, ref, atol=3e-2, rtol=3e-2)

    # Multi-tile (training-batch) path: grid >= 2, XLA-fused mean subtract.
    B2 = 300
    x2 = jax.random.normal(k_x2, (B2, STATE_SIZE), jnp.float32)
    out2 = jax.block_until_ready(qnet_dueling_forward(x2, params, tile_m=128))
    ref2 = reference_forward(x2, params)
    assert out2.shape == (B2, ACTION_SIZE)
    assert jnp.allclose(out2, ref2, atol=3e-2, rtol=3e-2)

    print("KERNEL_OK")
</pallas_src>

<mosaic_0001>
module attributes {stable_mosaic.version = 11 : i64} {
  func.func @mlp_fused_kernel(%arg0: i32, %arg1: memref<8x8xf32, #tpu.memory_space<vmem>>, %arg2: memref<8x256xbf16, #tpu.memory_space<vmem>>, %arg3: memref<2x256xf32, #tpu.memory_space<vmem>>, %arg4: memref<256x128xbf16, #tpu.memory_space<vmem>>, %arg5: memref<4x128xf32, #tpu.memory_space<vmem>>, %arg6: memref<128x8xbf16, #tpu.memory_space<vmem>>, %arg7: memref<8x4xf32, #tpu.memory_space<vmem>>) attributes {dimension_semantics = [#tpu.dimension_semantics<parallel>], iteration_bounds = array<i64: 1>, scalar_prefetch = 0 : i64, scratch_operands = 0 : i64, tpu.core_type = #tpu.core_type<tc>, window_params = [{pipeline_mode = #tpu.pipeline_mode<synchronous>, transform_indices = @transform_0, window_bounds = array<i64: 8, 8>}, {pipeline_mode = #tpu.pipeline_mode<synchronous>, transform_indices = @transform_1, window_bounds = array<i64: 8, 256>}, {pipeline_mode = #tpu.pipeline_mode<synchronous>, transform_indices = @transform_2, window_bounds = array<i64: 2, 256>}, {pipeline_mode = #tpu.pipeline_mode<synchronous>, transform_indices = @transform_3, window_bounds = array<i64: 256, 128>}, {pipeline_mode = #tpu.pipeline_mode<synchronous>, transform_indices = @transform_4, window_bounds = array<i64: 4, 128>}, {pipeline_mode = #tpu.pipeline_mode<synchronous>, transform_indices = @transform_5, window_bounds = array<i64: 128, 8>}, {pipeline_mode = #tpu.pipeline_mode<synchronous>, transform_indices = @transform_6, window_bounds = array<i64: 8, 4>}]} {
    %c0 = arith.constant 0 : index
    %c0_0 = arith.constant 0 : index
    %0 = vector.load %arg1[%c0, %c0_0] : memref<8x8xf32, #tpu.memory_space<vmem>>, vector<8x8xf32>
    %1 = arith.truncf %0 : vector<8x8xf32> to vector<8x8xbf16>
    %c0_1 = arith.constant 0 : index
    %c0_2 = arith.constant 0 : index
    %2 = vector.load %arg2[%c0_1, %c0_2] : memref<8x256xbf16, #tpu.memory_space<vmem>>, vector<8x256xbf16>
    %cst = arith.constant dense<0.000000e+00> : vector<8x256xf32>
    %3 = tpu.matmul %1, %2, %cst {dimension_numbers = #tpu.dot_dimension_numbers<[1], [0], [0], [1], [0, 0, 1, 1], [], []>} : vector<8x8xbf16>, vector<8x256xbf16>, vector<8x256xf32> -> vector<8x256xf32>
    %c0_3 = arith.constant 0 : index
    %c0_4 = arith.constant 0 : index
    %4 = vector.load %arg3[%c0_3, %c0_4] : memref<2x256xf32, #tpu.memory_space<vmem>>, vector<1x256xf32>
    %c1 = arith.constant 1 : index
    %c0_5 = arith.constant 0 : index
    %5 = vector.load %arg3[%c1, %c0_5] : memref<2x256xf32, #tpu.memory_space<vmem>>, vector<1x256xf32>
    %cst_6 = arith.constant dense<0.000000e+00> : vector<8xf32>
    %6 = vector.multi_reduction <add>, %3, %cst_6 [1] : vector<8x256xf32> to vector<8xf32>
    %7 = vector.shape_cast %6 : vector<8xf32> to vector<8x1xf32>
    %8 = arith.mulf %3, %3 : vector<8x256xf32>
    %cst_7 = arith.constant dense<0.000000e+00> : vector<8xf32>
    %9 = vector.multi_reduction <add>, %8, %cst_7 [1] : vector<8x256xf32> to vector<8xf32>
    %10 = vector.shape_cast %9 : vector<8xf32> to vector<8x1xf32>
    %cst_8 = arith.constant 3.906250e-03 : f32
    %11 = vector.broadcast %cst_8 : f32 to vector<8x1xf32>
    %12 = arith.mulf %7, %11 : vector<8x1xf32>
    %cst_9 = arith.constant 3.906250e-03 : f32
    %13 = vector.broadcast %cst_9 : f32 to vector<8x1xf32>
    %14 = arith.mulf %10, %13 : vector<8x1xf32>
    %15 = arith.mulf %12, %12 : vector<8x1xf32>
    %16 = arith.subf %14, %15 : vector<8x1xf32>
    %cst_10 = arith.constant 9.99999974E-6 : f32
    %17 = vector.broadcast %cst_10 : f32 to vector<8x1xf32>
    %18 = arith.addf %16, %17 : vector<8x1xf32>
    %19 = math.rsqrt %18 : vector<8x1xf32>
    %20 = vector.broadcast %12 : vector<8x1xf32> to vector<8x256xf32>
    %21 = arith.subf %3, %20 : vector<8x256xf32>
    %22 = vector.broadcast %19 : vector<8x1xf32> to vector<8x256xf32>
    %23 = arith.mulf %21, %22 : vector<8x256xf32>
    %24 = vector.broadcast %4 : vector<1x256xf32> to vector<8x256xf32>
    %25 = arith.mulf %23, %24 : vector<8x256xf32>
    %26 = vector.broadcast %5 : vector<1x256xf32> to vector<8x256xf32>
    %27 = arith.addf %25, %26 : vector<8x256xf32>
    %cst_11 = arith.constant 0.000000e+00 : f32
    %28 = vector.broadcast %cst_11 : f32 to vector<8x256xf32>
    %29 = arith.maximumf %27, %28 : vector<8x256xf32>
    %30 = arith.truncf %29 : vector<8x256xf32> to vector<8x256xbf16>
    %c0_12 = arith.constant 0 : index
    %c0_13 = arith.constant 0 : index
    %31 = vector.load %arg4[%c0_12, %c0_13] : memref<256x128xbf16, #tpu.memory_space<vmem>>, vector<256x128xbf16>
    %cst_14 = arith.constant dense<0.000000e+00> : vector<8x128xf32>
    %32 = tpu.matmul %30, %31, %cst_14 {dimension_numbers = #tpu.dot_dimension_numbers<[1], [0], [0], [1], [0, 0, 1, 1], [], []>} : vector<8x256xbf16>, vector<256x128xbf16>, vector<8x128xf32> -> vector<8x128xf32>
    %c0_15 = arith.constant 0 : index
    %c0_16 = arith.constant 0 : index
    %33 = vector.load %arg5[%c0_15, %c0_16] : memref<4x128xf32, #tpu.memory_space<vmem>>, vector<1x128xf32>
    %34 = vector.broadcast %33 : vector<1x128xf32> to vector<8x128xf32>
    %35 = arith.addf %32, %34 : vector<8x128xf32>
    %c1_17 = arith.constant 1 : index
    %c0_18 = arith.constant 0 : index
    %36 = vector.load %arg5[%c1_17, %c0_18] : memref<4x128xf32, #tpu.memory_space<vmem>>, vector<1x128xf32>
    %c2 = arith.constant 2 : index
    %c0_19 = arith.constant 0 : index
    %37 = vector.load %arg5[%c2, %c0_19] : memref<4x128xf32, #tpu.memory_space<vmem>>, vector<1x128xf32>
    %cst_20 = arith.constant dense<0.000000e+00> : vector<8xf32>
    %38 = vector.multi_reduction <add>, %35, %cst_20 [1] : vector<8x128xf32> to vector<8xf32>
    %39 = vector.shape_cast %38 : vector<8xf32> to vector<8x1xf32>
    %40 = arith.mulf %35, %35 : vector<8x128xf32>
    %cst_21 = arith.constant dense<0.000000e+00> : vector<8xf32>
    %41 = vector.multi_reduction <add>, %40, %cst_21 [1] : vector<8x128xf32> to vector<8xf32>
    %42 = vector.shape_cast %41 : vector<8xf32> to vector<8x1xf32>
    %cst_22 = arith.constant 7.812500e-03 : f32
    %43 = vector.broadcast %cst_22 : f32 to vector<8x1xf32>
    %44 = arith.mulf %39, %43 : vector<8x1xf32>
    %cst_23 = arith.constant 7.812500e-03 : f32
    %45 = vector.broadcast %cst_23 : f32 to vector<8x1xf32>
    %46 = arith.mulf %42, %45 : vector<8x1xf32>
    %47 = arith.mulf %44, %44 : vector<8x1xf32>
    %48 = arith.subf %46, %47 : vector<8x1xf32>
    %cst_24 = arith.constant 9.99999974E-6 : f32
    %49 = vector.broadcast %cst_24 : f32 to vector<8x1xf32>
    %50 = arith.addf %48, %49 : vector<8x1xf32>
    %51 = math.rsqrt %50 : vector<8x1xf32>
    %52 = vector.broadcast %44 : vector<8x1xf32> to vector<8x128xf32>
    %53 = arith.subf %35, %52 : vector<8x128xf32>
    %54 = vector.broadcast %51 : vector<8x1xf32> to vector<8x128xf32>
    %55 = arith.mulf %53, %54 : vector<8x128xf32>
    %56 = vector.broadcast %36 : vector<1x128xf32> to vector<8x128xf32>
    %57 = arith.mulf %55, %56 : vector<8x128xf32>
    %58 = vector.broadcast %37 : vector<1x128xf32> to vector<8x128xf32>
    %59 = arith.addf %57, %58 : vector<8x128xf32>
    %cst_25 = arith.constant 0.000000e+00 : f32
    %60 = vector.broadcast %cst_25 : f32 to vector<8x128xf32>
    %61 = arith.maximumf %59, %60 : vector<8x128xf32>
    %c3 = arith.constant 3 : index
    %c0_26 = arith.constant 0 : index
    %62 = vector.load %arg5[%c3, %c0_26] : memref<4x128xf32, #tpu.memory_space<vmem>>, vector<1x128xf32>
    %63 = vector.extract_strided_slice %62 {offsets = [0, 0], sizes = [1, 8], strides = [1, 1]} : vector<1x128xf32> to vector<1x8xf32>
    %64 = arith.truncf %61 : vector<8x128xf32> to vector<8x128xbf16>
    %c0_27 = arith.constant 0 : index
    %c0_28 = arith.constant 0 : index
    %65 = vector.load %arg6[%c0_27, %c0_28] : memref<128x8xbf16, #tpu.memory_space<vmem>>, vector<128x8xbf16>
    %cst_29 = arith.constant dense<0.000000e+00> : vector<8x8xf32>
    %66 = tpu.matmul %64, %65, %cst_29 {dimension_numbers = #tpu.dot_dimension_numbers<[1], [0], [0], [1], [0, 0, 1, 1], [], []>} : vector<8x128xbf16>, vector<128x8xbf16>, vector<8x8xf32> -> vector<8x8xf32>
    %67 = vector.broadcast %63 : vector<1x8xf32> to vector<8x8xf32>
    %68 = arith.addf %66, %67 : vector<8x8xf32>
    %69 = vector.extract_strided_slice %68 {offsets = [0, 4], sizes = [8, 1], strides = [1, 1]} : vector<8x8xf32> to vector<8x1xf32>
    %70 = vector.shape_cast %69 : vector<8x1xf32> to vector<1x8x1xf32>
    %cst_30 = arith.constant dense<0.000000e+00> : vector<1xf32>
    %71 = vector.multi_reduction <add>, %70, %cst_30 [1, 2] : vector<1x8x1xf32> to vector<1xf32>
    %72 = vector.shape_cast %71 : vector<1xf32> to vector<1x1x1xf32>
    %73 = vector.extract %72[0, 0, 0] : f32 from vector<1x1x1xf32>
    %cst_31 = arith.constant 3.125000e-02 : f32
    %74 = arith.mulf %73, %cst_31 : f32
    %75 = vector.extract_strided_slice %68 {offsets = [0, 0], sizes = [8, 4], strides = [1, 1]} : vector<8x8xf32> to vector<8x4xf32>
    %76 = vector.broadcast %74 : f32 to vector<8x4xf32>
    %77 = arith.subf %75, %76 : vector<8x4xf32>
    %c0_32 = arith.constant 0 : index
    %c0_33 = arith.constant 0 : index
    %78 = vector.load %arg7[%c0_32, %c0_33] : memref<8x4xf32, #tpu.memory_space<vmem>>, vector<8x4xf32>
    tpu.vector_store %arg7[%c0_32, %c0_33], %77 {strides = array<i32>} : memref<8x4xf32, #tpu.memory_space<vmem>>, vector<8x4xf32>,
    return
  }
  func.func @transform_0(%arg0: i32) -> (i32, i32) {
    %c0_i32 = arith.constant 0 : i32
    %c0_i32_0 = arith.constant 0 : i32
    %c0_i32_1 = arith.constant 0 : i32
    return %c0_i32, %c0_i32_0 : i32, i32
  }
  func.func @transform_1(%arg0: i32) -> (i32, i32) {
    %c0_i32 = arith.constant 0 : i32
    %c0_i32_0 = arith.constant 0 : i32
    %c0_i32_1 = arith.constant 0 : i32
    return %c0_i32, %c0_i32_0 : i32, i32
  }
  func.func @transform_2(%arg0: i32) -> (i32, i32) {
    %c0_i32 = arith.constant 0 : i32
    %c0_i32_0 = arith.constant 0 : i32
    %c0_i32_1 = arith.constant 0 : i32
    return %c0_i32, %c0_i32_0 : i32, i32
  }
  func.func @transform_3(%arg0: i32) -> (i32, i32) {
    %c0_i32 = arith.constant 0 : i32
    %c0_i32_0 = arith.constant 0 : i32
    %c0_i32_1 = arith.constant 0 : i32
    return %c0_i32, %c0_i32_0 : i32, i32
  }
  func.func @transform_4(%arg0: i32) -> (i32, i32) {
    %c0_i32 = arith.constant 0 : i32
    %c0_i32_0 = arith.constant 0 : i32
    %c0_i32_1 = arith.constant 0 : i32
    return %c0_i32, %c0_i32_0 : i32, i32
  }
  func.func @transform_5(%arg0: i32) -> (i32, i32) {
    %c0_i32 = arith.constant 0 : i32
    %c0_i32_0 = arith.constant 0 : i32
    %c0_i32_1 = arith.constant 0 : i32
    return %c0_i32, %c0_i32_0 : i32, i32
  }
  func.func @transform_6(%arg0: i32) -> (i32, i32) {
    %c0_i32 = arith.constant 0 : i32
    %c0_i32_0 = arith.constant 0 : i32
    %c0_i32_1 = arith.constant 0 : i32
    return %c0_i32, %c0_i32_0 : i32, i32
  }
}

</mosaic_0001>

<llo_original>
// kernel: tpu_custom_call.1
$region0: #{tpu_custom_call.1}
  #allocation0 [shape = 'u32[]', space=smem, size = 0x4, offset = 0x4, fixed_abs, tag = 'smem constant byte address 0x4 - core index']
  #allocation1 [shape = 'u32[144,128]{1,0:T(1,128)}', space=vmem, size = 0x12000, scoped, tag = 'internal scratch']
  %s0 = inlined_call_operand.vmem [shape: f32[8,8], index: 0, kind: input, shape index: {}]
  %s1 = inlined_call_operand.vmem [shape: bf16[8,256], index: 1, kind: input, shape index: {}]
  %s2 = inlined_call_operand.vmem [shape: f32[2,256], index: 2, kind: input, shape index: {}]
  %s3 = inlined_call_operand.hbm [shape: bf16[256,128], index: 3, kind: input, shape index: {}]
  %s4 = inlined_call_operand.vmem [shape: f32[4,128], index: 4, kind: input, shape index: {}]
  %s5 = inlined_call_operand.vmem [shape: bf16[128,8], index: 5, kind: input, shape index: {}]
  %s6 = inlined_call_operand.vmem [shape: f32[8,4], index: 6, kind: output, shape index: {}]
  %s7 = sld [smem:[#allocation0]]
  $region38: #{tpu_custom_call.1} parent=0
    _
  %s9 = ssub.s32 1, %s7
  %s10 = scalar_select 0, %s9, %s7
  $region1: #{tpu_custom_call.1} parent=0
    #allocation2 [shape = 'u8[65536]{0}', space=vmem, size = 0x10000, scoped, tag = 'input window, operand 3, single buffered']
    #allocation3 [shape = 's32[1]{0}', space=sflag, size = 0x4, scoped, tag = 'scoped memory for tpu_custom_call.1']
    %11 = vsyncpa [#allocation3], 0
    // Predicated region
    $region2: #{tpu_custom_call.1} parent=1 // pred_check
      _
    $region3: #{tpu_custom_call.1} parent=1 // pred_check_branch
      %13 = sbr.rel (0) target = $region5
    $region4: #{tpu_custom_call.1} parent=1 // pred_region
      _
    $region5: #{tpu_custom_call.1} parent=1 // pred_fallthru
      _
    // Predicated region
    $region6: #{tpu_custom_call.1} parent=1 // pred_check
      _
    $region7: #{tpu_custom_call.1} parent=1 // pred_check_branch
      %15 = sbr.rel (0) target = $region9
    $region8: #{tpu_custom_call.1} parent=1 // pred_region
      _
    $region9: #{tpu_custom_call.1} parent=1 // pred_fallthru
      _
    // Predicated region
    $region10: #{tpu_custom_call.1} parent=1 // pred_check
      _
    $region11: #{tpu_custom_call.1} parent=1 // pred_check_branch
      %17 = sbr.rel (0) target = $region13
    $region12: #{tpu_custom_call.1} parent=1 // pred_region
      _
    $region13: #{tpu_custom_call.1} parent=1 // pred_fallthru
      _
    // Predicated region
    $region14: #{tpu_custom_call.1} parent=1 // pred_check
      _
    $region15: #{tpu_custom_call.1} parent=1 // pred_check_branch
      %19 = sbr.rel (0) target = $region17
    $region16: #{tpu_custom_call.1} parent=1 // pred_region
      %s21 = ssub.s32 2048, 2048
      %22 = vsyncadd [#allocation3], %s21
      %s23 = sshll.u32 [#allocation2], 4
      %s24 = int_to_ptr.vmem [resolvable:$true] %s23
      %29 = dma.hbm_to_vmem [thread:$0]  %s3, 2048, %s24, [#allocation3], 64, 64, 4
    $region17: #{tpu_custom_call.1} parent=1 // pred_fallthru
      _
    // Predicated region
    $region18: #{tpu_custom_call.1} parent=1 // pred_check
      _
    $region19: #{tpu_custom_call.1} parent=1 // pred_check_branch
      %31 = sbr.rel (0) target = $region21
    $region20: #{tpu_custom_call.1} parent=1 // pred_region
      _
    $region21: #{tpu_custom_call.1} parent=1 // pred_fallthru
      _
    // Predicated region
    $region22: #{tpu_custom_call.1} parent=1 // pred_check
      _
    $region23: #{tpu_custom_call.1} parent=1 // pred_check_branch
      %33 = sbr.rel (0) target = $region25
    $region24: #{tpu_custom_call.1} parent=1 // pred_region
      _
    $region25: #{tpu_custom_call.1} parent=1 // pred_fallthru
      _
    // Predicated region
    $region26: #{tpu_custom_call.1} parent=1 // pred_check
      _
    $region27: #{tpu_custom_call.1} parent=1 // pred_check_branch
      %35 = sbr.rel (0) target = $region29
    $region28: #{tpu_custom_call.1} parent=1 // pred_region
      %36 = dma.done [#allocation3], 2048
    $region29: #{tpu_custom_call.1} parent=1 // pred_fallthru
      _
    %v38 = vld [vmem:[%s0] sm:$0xff]
    %v39 = vpack.c.bf16 %v38, %v38
    %v40 = vld [vmem:[%s1] sm:$0xff]
    %v42 = vunpack.c.l.b16 %v40
    %v43 = vunpack.c.h.b16 %v40
    %v44 = vpack.c.b16 %v42, %v42
    %v45 = vpack.c.b16 %v43, %v43
    %vm46 = vcmask 64512
    %v48 = vsel %vm46, %v39, 0
    %vm50 = vcmask 1043456
    %v52 = vsel %vm50, %v44, 0
    %v55 = vsel %vm50, %v45, 0
    %57 = vmatprep.subr.bf16.mxu0 %v55
    %58 = vmatpush1.bf16.msra.mxu0 %v52
    %59 = vmatprep.subr.bf16.mxu0 0
    %60 = vmatpush1.bf16.msra.mxu0 0
    %61 = vmatprep.subr.bf16.mxu0 0
    %62 = vmatpush1.bf16.msra.mxu0 0
    %63 = vmatprep.subr.bf16.mxu0 0
    %64 = vmatpush1.bf16.msra.mxu0 0
    %65 = vmatprep.subr.bf16.mxu0 0
    %66 = vmatpush1.bf16.msra.mxu0 0
    %67 = vmatprep.subr.bf16.mxu0 0
    %68 = vmatpush1.bf16.msra.mxu0 0
    %69 = vmatprep.subr.bf16.mxu0 0
    %70 = vmatpush1.bf16.msra.mxu0 0
    %71 = vmatprep.subr.bf16.mxu0 0
    %72 = vmatpush1.bf16.msra.mxu0 0
    %73 = vmatprep.subr.bf16.mxu0 0
    %74 = vmatpush1.bf16.msra.mxu0 0
    %75 = vmatprep.subr.bf16.mxu0 0
    %76 = vmatpush1.bf16.msra.mxu0 0
    %77 = vmatprep.subr.bf16.mxu0 0
    %78 = vmatpush1.bf16.msra.mxu0 0
    %79 = vmatprep.subr.bf16.mxu0 0
    %80 = vmatpush1.bf16.msra.mxu0 0
    %81 = vmatprep.subr.bf16.mxu0 0
    %82 = vmatpush1.bf16.msra.mxu0 0
    %83 = vmatprep.subr.bf16.mxu0 0
    %84 = vmatpush1.bf16.msra.mxu0 0
    %85 = vmatprep.subr.bf16.mxu0 0
    %86 = vmatpush1.bf16.msra.mxu0 0
    %87 = vmatprep.subr.bf16.mxu0 0
    %88 = vmatpush1.bf16.msra.mxu0 0
    %89 = vmatprep.mubr.bf16.mxu0 0
    %90 = vmatmul.mubr.bf16.gmra.mrb[0].mxu0 %v48
    %v91 = vpop.f32.mrb[0].mxu0
    %v92 = vadd.f32 0.0, %v91
    %v93 = vpop.f32.mrb[0].mxu0
    %v94 = vadd.f32 0.0, %v93
    %v95 = vpop.f32.mrb[0].mxu0
    %v96 = vpop.f32.mrb[0].mxu0
    %97 = vdwg.mxu0
    %v98 = vld [vmem:[%s2] ss:$2 sm:$0x3]
    %s99 = scalar_lea.vmem %s2, 1
    %v100 = vld [vmem:[%s99] ss:$2 sm:$0x3]
    %v101 = vadd.f32 %v92, %v94
    %102 = vadd.xlane.f32.xlu0 %v101
    %v103 = vpop.xlane.xlu0 %102
    %v104 = vmul.f32 %v92, %v92
    %v105 = vmul.f32 %v94, %v94
    %v106 = vadd.f32 %v104, %v105
    %107 = vadd.xlane.f32.xlu0 %v106
    %v108 = vpop.xlane.xlu0 %107
    %v109 = vmul.f32 %v103, 0.00390625
    %v110 = vmul.f32 %v108, 0.00390625
    %v111 = vmul.f32 %v109, %v109
    %v112 = vsub.f32 %v110, %v111
    %v113 = vadd.f32 %v112, 1e-05
    %v114 = vrsqrt.pop %v113
    %v115 = vsub.f32 %v92, %v109
    %v116 = vsub.f32 %v94, %v109
    %v117 = vmul.f32 %v115, %v114
    %v118 = vmul.f32 %v116, %v114
    %v120 = vlaneseq
    %v121 = vshrl.u32 %v120, 7
    %v122 = vsub.s32 0, %v121
    %v123 = vrot.slane %v98, %v122
    %v124 = vlaneseq
    %v125 = vshrl.u32 %v124, 7
    %v126 = vsub.s32 1, %v125
    %v127 = vrot.slane %v98, %v126
    %v130 = vmul.f32 %v117, %v123
    %v131 = vmul.f32 %v118, %v127
    %v133 = vlaneseq
    %v134 = vshrl.u32 %v133, 7
    %v135 = vsub.s32 0, %v134
    %v136 = vrot.slane %v100, %v135
    %v137 = vlaneseq
    %v138 = vshrl.u32 %v137, 7
    %v139 = vsub.s32 1, %v138
    %v140 = vrot.slane %v100, %v139
    %v143 = vadd.f32 %v130, %v136
    %v144 = vadd.f32 %v131, %v140
    %v145 = vmax.f32 %v143, 0.0
    %v146 = vmax.f32 %v144, 0.0
    %v147 = vpack.c.bf16 %v145, %v145
    %v148 = vpack.c.bf16 %v146, %v146
    %v149 = vld [vmem:[#allocation2] sm:$0xf]
    %v150 = vld [vmem:[#allocation2 + $0x4] sm:$0xf]
    %v151 = vld [vmem:[#allocation2 + $0x8] sm:$0xf]
    %v152 = vld [vmem:[#allocation2 + $0xc] sm:$0xf]
    %v153 = vld [vmem:[#allocation2 + $0x10] sm:$0xf]
    %v154 = vld [vmem:[#allocation2 + $0x14] sm:$0xf]
    %v155 = vld [vmem:[#allocation2 + $0x18] sm:$0xf]
    %v156 = vld [vmem:[#allocation2 + $0x1c] sm:$0xf]
    %v157 = vld [vmem:[#allocation2 + $0x20] sm:$0xf]
    %v158 = vld [vmem:[#allocation2 + $0x24] sm:$0xf]
    %v159 = vld [vmem:[#allocation2 + $0x28] sm:$0xf]
    %v160 = vld [vmem:[#allocation2 + $0x2c] sm:$0xf]
    %v161 = vld [vmem:[#allocation2 + $0x30] sm:$0xf]
    %v162 = vld [vmem:[#allocation2 + $0x34] sm:$0xf]
    %v163 = vld [vmem:[#allocation2 + $0x38] sm:$0xf]
    %v164 = vld [vmem:[#allocation2 + $0x3c] sm:$0xf]
    %v165 = vld [vmem:[#allocation2 + $0x40] sm:$0xf]
    %v166 = vld [vmem:[#allocation2 + $0x44] sm:$0xf]
    %v167 = vld [vmem:[#allocation2 + $0x48] sm:$0xf]
    %v168 = vld [vmem:[#allocation2 + $0x4c] sm:$0xf]
    %v169 = vld [vmem:[#allocation2 + $0x50] sm:$0xf]
    %v170 = vld [vmem:[#allocation2 + $0x54] sm:$0xf]
    %v171 = vld [vmem:[#allocation2 + $0x58] sm:$0xf]
    %v172 = vld [vmem:[#allocation2 + $0x5c] sm:$0xf]
    %v173 = vld [vmem:[#allocation2 + $0x60] sm:$0xf]
    %v174 = vld [vmem:[#allocation2 + $0x64] sm:$0xf]
    %v175 = vld [vmem:[#allocation2 + $0x68] sm:$0xf]
    %v176 = vld [vmem:[#allocation2 + $0x6c] sm:$0xf]
    %v177 = vld [vmem:[#allocation2 + $0x70] sm:$0xf]
    %v178 = vld [vmem:[#allocation2 + $0x74] sm:$0xf]
    %v179 = vld [vmem:[#allocation2 + $0x78] sm:$0xf]
    %v180 = vld [vmem:[#allocation2 + $0x7c] sm:$0xf]
    %v181 = vld [vmem:[%s4] sm:$0x1]
    %v182 = vlaneseq
    %v183 = vshrl.u32 %v182, 7
    %v184 = vsub.s32 0, %v183
    %v185 = vrot.slane %v181, %v184
    %v218 = vunpack.c.l.b16 %v149
    %v219 = vunpack.c.l.b16 %v150
    %v220 = vunpack.c.l.b16 %v151
    %v221 = vunpack.c.l.b16 %v152
    %v222 = vunpack.c.l.b16 %v153
    %v223 = vunpack.c.l.b16 %v154
    %v224 = vunpack.c.l.b16 %v155
    %v225 = vunpack.c.l.b16 %v156
    %v226 = vunpack.c.l.b16 %v157
    %v227 = vunpack.c.l.b16 %v158
    %v228 = vunpack.c.l.b16 %v159
    %v229 = vunpack.c.l.b16 %v160
    %v230 = vunpack.c.l.b16 %v161
    %v231 = vunpack.c.l.b16 %v162
    %v232 = vunpack.c.l.b16 %v163
    %v233 = vunpack.c.l.b16 %v164
    %v234 = vunpack.c.l.b16 %v165
    %v235 = vunpack.c.l.b16 %v166
    %v236 = vunpack.c.l.b16 %v167
    %v237 = vunpack.c.l.b16 %v168
    %v238 = vunpack.c.l.b16 %v169
    %v239 = vunpack.c.l.b16 %v170
    %v240 = vunpack.c.l.b16 %v171
    %v241 = vunpack.c.l.b16 %v172
    %v242 = vunpack.c.l.b16 %v173
    %v243 = vunpack.c.l.b16 %v174
    %v244 = vunpack.c.l.b16 %v175
    %v245 = vunpack.c.l.b16 %v176
    %v246 = vunpack.c.l.b16 %v177
    %v247 = vunpack.c.l.b16 %v178
    %v248 = vunpack.c.l.b16 %v179
    %v249 = vunpack.c.l.b16 %v180
    %v250 = vpack.c.b16 %v219, %v218
    %v251 = vpack.c.b16 %v221, %v220
    %v252 = vpack.c.b16 %v223, %v222
    %v253 = vpack.c.b16 %v225, %v224
    %v254 = vpack.c.b16 %v227, %v226
    %v255 = vpack.c.b16 %v229, %v228
    %v256 = vpack.c.b16 %v231, %v230
    %v257 = vpack.c.b16 %v233, %v232
    %v258 = vpack.c.b16 %v235, %v234
    %v259 = vpack.c.b16 %v237, %v236
    %v260 = vpack.c.b16 %v239, %v238
    %v261 = vpack.c.b16 %v241, %v240
    %v262 = vpack.c.b16 %v243, %v242
    %v263 = vpack.c.b16 %v245, %v244
    %v264 = vpack.c.b16 %v247, %v246
    %v265 = vpack.c.b16 %v249, %v248
    %282 = vmatprep.subr.bf16.mxu0 0
    %283 = vmatpush1.bf16.msra.mxu0 %v250
    %284 = vmatprep.subr.bf16.mxu0 0
    %285 = vmatpush1.bf16.msra.mxu0 %v251
    %286 = vmatprep.subr.bf16.mxu0 0
    %287 = vmatpush1.bf16.msra.mxu0 %v252
    %288 = vmatprep.subr.bf16.mxu0 0
    %289 = vmatpush1.bf16.msra.mxu0 %v253
    %290 = vmatprep.subr.bf16.mxu0 0
    %291 = vmatpush1.bf16.msra.mxu0 %v254
    %292 = vmatprep.subr.bf16.mxu0 0
    %293 = vmatpush1.bf16.msra.mxu0 %v255
    %294 = vmatprep.subr.bf16.mxu0 0
    %295 = vmatpush1.bf16.msra.mxu0 %v256
    %296 = vmatprep.subr.bf16.mxu0 0
    %297 = vmatpush1.bf16.msra.mxu0 %v257
    %298 = vmatprep.subr.bf16.mxu0 0
    %299 = vmatpush1.bf16.msra.mxu0 %v258
    %300 = vmatprep.subr.bf16.mxu0 0
    %301 = vmatpush1.bf16.msra.mxu0 %v259
    %302 = vmatprep.subr.bf16.mxu0 0
    %303 = vmatpush1.bf16.msra.mxu0 %v260
    %304 = vmatprep.subr.bf16.mxu0 0
    %305 = vmatpush1.bf16.msra.mxu0 %v261
    %306 = vmatprep.subr.bf16.mxu0 0
    %307 = vmatpush1.bf16.msra.mxu0 %v262
    %308 = vmatprep.subr.bf16.mxu0 0
    %309 = vmatpush1.bf16.msra.mxu0 %v263
    %310 = vmatprep.subr.bf16.mxu0 0
    %311 = vmatpush1.bf16.msra.mxu0 %v264
    %312 = vmatprep.subr.bf16.mxu0 0
    %313 = vmatpush1.bf16.msra.mxu0 %v265
    %314 = vmatprep.mubr.bf16.mxu0 %v148
    %315 = vmatmul.mubr.bf16.gmra.mrb[0].mxu0 %v147
    %v316 = vpop.f32.mrb[0].mxu0
    %v317 = vadd.f32 %v185, %v316
    %v318 = vpop.f32.mrb[0].mxu0
    %v319 = vpop.f32.mrb[0].mxu0
    %v320 = vpop.f32.mrb[0].mxu0
    %321 = vdwg.mxu0
    %v322 = vld [vmem:[%s4 + $0x1] sm:$0x1]
    %v323 = vld [vmem:[%s4 + $0x2] sm:$0x1]
    %324 = vadd.xlane.f32.xlu0 %v317
    %v325 = vpop.xlane.xlu0 %324
    %v326 = vmul.f32 %v317, %v317
    %327 = vadd.xlane.f32.xlu0 %v326
    %v328 = vpop.xlane.xlu0 %327
    %v329 = vmul.f32 %v325, 0.0078125
    %v330 = vmul.f32 %v328, 0.0078125
    %v331 = vmul.f32 %v329, %v329
    %v332 = vsub.f32 %v330, %v331
    %v333 = vadd.f32 %v332, 1e-05
    %v334 = vrsqrt.pop %v333
    %v335 = vsub.f32 %v317, %v329
    %v336 = vmul.f32 %v335, %v334
    %v337 = vlaneseq
    %v338 = vshrl.u32 %v337, 7
    %v339 = vsub.s32 0, %v338
    %v340 = vrot.slane %v322, %v339
    %v341 = vmul.f32 %v336, %v340
    %v342 = vlaneseq
    %v343 = vshrl.u32 %v342, 7
    %v344 = vsub.s32 0, %v343
    %v345 = vrot.slane %v323, %v344
    %v346 = vadd.f32 %v341, %v345
    %v347 = vmax.f32 %v346, 0.0
    %v348 = vld [vmem:[%s4 + $0x3] sm:$0x1]
    %v349 = vpack.c.bf16 %v347, %v347
    %v350 = vld [vmem:[%s5] sm:$0xf]
    %v351 = vld [vmem:[%s5 + $0x4] sm:$0xf]
    %v352 = vld [vmem:[%s5 + $0x8] sm:$0xf]
    %v353 = vld [vmem:[%s5 + $0xc] sm:$0xf]
    %v354 = vld [vmem:[%s5 + $0x10] sm:$0xf]
    %v355 = vld [vmem:[%s5 + $0x14] sm:$0xf]
    %v356 = vld [vmem:[%s5 + $0x18] sm:$0xf]
    %v357 = vld [vmem:[%s5 + $0x1c] sm:$0xf]
    %v358 = vld [vmem:[%s5 + $0x20] sm:$0xf]
    %v359 = vld [vmem:[%s5 + $0x24] sm:$0xf]
    %v360 = vld [vmem:[%s5 + $0x28] sm:$0xf]
    %v361 = vld [vmem:[%s5 + $0x2c] sm:$0xf]
    %v362 = vld [vmem:[%s5 + $0x30] sm:$0xf]
    %v363 = vld [vmem:[%s5 + $0x34] sm:$0xf]
    %v364 = vld [vmem:[%s5 + $0x38] sm:$0xf]
    %v365 = vld [vmem:[%s5 + $0x3c] sm:$0xf]
    %v366 = vlaneseq
    %v367 = vshrl.u32 %v366, 7
    %v368 = vsub.s32 0, %v367
    %v369 = vrot.slane %v348, %v368
    %v386 = vunpack.c.l.b16 %v350
    %v387 = vunpack.c.l.b16 %v351
    %v388 = vunpack.c.l.b16 %v352
    %v389 = vunpack.c.l.b16 %v353
    %v390 = vunpack.c.l.b16 %v354
    %v391 = vunpack.c.l.b16 %v355
    %v392 = vunpack.c.l.b16 %v356
    %v393 = vunpack.c.l.b16 %v357
    %v394 = vunpack.c.l.b16 %v358
    %v395 = vunpack.c.l.b16 %v359
    %v396 = vunpack.c.l.b16 %v360
    %v397 = vunpack.c.l.b16 %v361
    %v398 = vunpack.c.l.b16 %v362
    %v399 = vunpack.c.l.b16 %v363
    %v400 = vunpack.c.l.b16 %v364
    %v401 = vunpack.c.l.b16 %v365
    %v402 = vpack.c.b16 %v387, %v386
    %v403 = vpack.c.b16 %v389, %v388
    %v404 = vpack.c.b16 %v391, %v390
    %v405 = vpack.c.b16 %v393, %v392
    %v406 = vpack.c.b16 %v395, %v394
    %v407 = vpack.c.b16 %v397, %v396
    %v408 = vpack.c.b16 %v399, %v398
    %v409 = vpack.c.b16 %v401, %v400
    %418 = vmatprep.subr.bf16.mxu0 0
    %419 = vmatpush1.bf16.msra.mxu0 %v402
    %420 = vmatprep.subr.bf16.mxu0 0
    %421 = vmatpush1.bf16.msra.mxu0 %v403
    %422 = vmatprep.subr.bf16.mxu0 0
    %423 = vmatpush1.bf16.msra.mxu0 %v404
    %424 = vmatprep.subr.bf16.mxu0 0
    %425 = vmatpush1.bf16.msra.mxu0 %v405
    %426 = vmatprep.subr.bf16.mxu0 0
    %427 = vmatpush1.bf16.msra.mxu0 %v406
    %428 = vmatprep.subr.bf16.mxu0 0
    %429 = vmatpush1.bf16.msra.mxu0 %v407
    %430 = vmatprep.subr.bf16.mxu0 0
    %431 = vmatpush1.bf16.msra.mxu0 %v408
    %432 = vmatprep.subr.bf16.mxu0 0
    %433 = vmatpush1.bf16.msra.mxu0 %v409
    %434 = vmatprep.subr.bf16.mxu0 0
    %435 = vmatpush1.bf16.msra.mxu0 0
    %436 = vmatprep.subr.bf16.mxu0 0
    %437 = vmatpush1.bf16.msra.mxu0 0
    %438 = vmatprep.subr.bf16.mxu0 0
    %439 = vmatpush1.bf16.msra.mxu0 0
    %440 = vmatprep.subr.bf16.mxu0 0
    %441 = vmatpush1.bf16.msra.mxu0 0
    %442 = vmatprep.subr.bf16.mxu0 0
    %443 = vmatpush1.bf16.msra.mxu0 0
    %444 = vmatprep.subr.bf16.mxu0 0
    %445 = vmatpush1.bf16.msra.mxu0 0
    %446 = vmatprep.subr.bf16.mxu0 0
    %447 = vmatpush1.bf16.msra.mxu0 0
    %448 = vmatprep.subr.bf16.mxu0 0
    %449 = vmatpush1.bf16.msra.mxu0 0
    %450 = vmatprep.mubr.bf16.mxu0 0
    %451 = vmatmul.mubr.bf16.gmra.mrb[0].mxu0 %v349
    %v452 = vpop.f32.mrb[0].mxu0
    %v453 = vadd.f32 %v369, %v452
    %v454 = vpop.f32.mrb[0].mxu0
    %v455 = vpop.f32.mrb[0].mxu0
    %v456 = vpop.f32.mrb[0].mxu0
    %457 = vdwg.mxu0
    %459 = vrot.lane.b32.xlu0 %v453, 124
    %v460 = vpop.permute.xlu0 %459
    %vm462 = vcmask 7168
    %v463 = vsel %vm462, %v460, 0.0
    %464 = vadd.xlane.f32.xlu0 %v463
    %v465 = vpop.xlane.xlu0 %464
    %v466 = vrot.slane %v465, 4
    %v467 = vadd.f32 %v465, %v466
    %v468 = vrot.slane %v467, 2
    %v469 = vadd.f32 %v467, %v468
    %v470 = vrot.slane %v469, 1
    %v471 = vadd.f32 %v469, %v470
    %s472 = vtos %v471
    %s473 = smul.f32 %s472, 0.03125
    %v474 = vstv %s473
    %v475 = vsub.f32 %v453, %v474
    %vm476 = vcmask 31744
    %477 = vst.msk [vmem:[%s6] sm:$0xff] %vm476, %v475
    // Predicated region
    $region30: #{tpu_custom_call.1} parent=1 // pred_check
      _
    $region31: #{tpu_custom_call.1} parent=1 // pred_check_branch
      %479 = sbr.rel (0) target = $region33
    $region32: #{tpu_custom_call.1} parent=1 // pred_region
      _
    $region33: #{tpu_custom_call.1} parent=1 // pred_fallthru
      _
    // Predicated region
    $region34: #{tpu_custom_call.1} parent=1 // pred_check
      _
    $region35: #{tpu_custom_call.1} parent=1 // pred_check_branch
      %481 = sbr.rel (0) target = $region37
    $region36: #{tpu_custom_call.1} parent=1 // pred_region
      _
    $region37: #{tpu_custom_call.1} parent=1 // pred_fallthru
      _
    %482 = vsyncpa [#allocation3], 1

</llo_original>
